<compile_context>
chip_gen: v6e
topology: v6e:2x2x1
jax: 0.10.0
libtpu: 0.0.40
codegen_flags: <defaults>
</compile_context>

<pallas_src>
import functools

import jax
import jax.numpy as jnp
from jax.experimental import pallas as pl
from jax.experimental.pallas import tpu as pltpu

GN_EPS = 1e-5


# ---------------------------------------------------------------------------
# Auto-crop glue (exact replica of the PyTorch slicing arithmetic)
# ---------------------------------------------------------------------------
def auto_crop(tensor, skip_connection):
    if tensor.shape[2:] != skip_connection.shape[2:]:
        target_shape = tensor.shape[2:]
        orig_shape = skip_connection.shape[2:]
        diff = [orig - trg for orig, trg in zip(orig_shape, target_shape)]
        crop_backbone = True
        if not all(d >= 0 for d in diff):
            crop_backbone = False
            orig_shape, target_shape = (target_shape, orig_shape)
            diff = [orig - trg for orig, trg in zip(orig_shape, target_shape)]
        left_crops = [int(d / 2) for d in diff]
        right_crops = [shp - int(d / 2) if d % 2 == 0 else shp - (int(d / 2) + 1)
                       for d, shp in zip(diff, orig_shape)]
        crop_slice = (slice(None), slice(None)) + tuple(
            slice(lft, rgt) for rgt, lft in zip(right_crops, left_crops))
        if crop_backbone:
            skip_connection = skip_connection[crop_slice]
        else:
            tensor = tensor[crop_slice]
    return tensor, skip_connection


# ---------------------------------------------------------------------------
# Helpers
# ---------------------------------------------------------------------------
def _cdiv(a, b):
    return -(-a // b)


def _vmem_limit_bytes():
    """Generation-aware scoped-VMEM limit (~45% of physical VMEM per core)."""
    cap = None
    try:
        cap = int(getattr(pltpu.get_tpu_info(), "vmem_capacity_bytes", 0)) or None
    except Exception:
        cap = None
    if cap is None:
        cap = 64 << 20          # conservative floor: v7x per-TensorCore VMEM
    return int(max(16 << 20, min(int(0.45 * cap), 100 << 20)))


def _choose_s_tile(S, chan_rows, stream_budget_bytes, max_lanes=65536):
    """Pick the spatial (lane) tile: a multiple of 128 (or == S).

    `chan_rows` = f32 channel-rows resident per lane position (streamed operands
    counted once each — they are double-buffered below — plus temp headroom);
    `stream_budget_bytes` bounds their total VMEM footprint."""
    per_step = stream_budget_bytes // 2              # double-buffered pipeline
    lanes = per_step // (4 * max(chan_rows, 1))
    lanes = (lanes // 128) * 128
    lanes = int(max(128, min(int(max_lanes), lanes)))
    return int(S) if S <= lanes else lanes


def _conv1x1(x, w, b, *, use_vpu):
    """1x1x1 conv in channel-major layout.

    x: [Cin, S_tile], w: [Cout, Cin], b: [Cout, 1] -> f32 [Cout, S_tile]."""
    if use_vpu:
        # Tiny channel counts only: broadcast-FMA on the VPU.
        cout, cin = w.shape
        acc = w[:, 0:1] * x[0:1, :]
        for ci in range(1, cin):
            acc = acc + w[:, ci:ci + 1] * x[ci:ci + 1, :]
        return acc + b
    # MXU path (HBM-bound op; f32 accumulation).
    return jnp.dot(w, x, preferred_element_type=jnp.float32) + b


# ---------------------------------------------------------------------------
# Pallas kernels
# ---------------------------------------------------------------------------
def _add_kernel(skip_ref, tens_ref, o_ref):
    o_ref[...] = skip_ref[...] + tens_ref[...]


def _fused_kernel(skip_ref, tens_ref, w_ref, b_ref, gamma_ref, beta_ref, o_ref,
                  *, groups, cpg, use_vpu):
    """Whole-sample resident path: conv once, GN stats in-kernel, apply."""
    conv = _conv1x1(skip_ref[0], w_ref[...], b_ref[...], use_vpu=use_vpu)
    csum = jnp.sum(conv, axis=1, keepdims=True)              # (Cout, 1)
    csq = jnp.sum(conv * conv, axis=1, keepdims=True)        # (Cout, 1)
    count = float(conv.shape[1] * cpg)
    cidx = jax.lax.broadcasted_iota(jnp.int32, csum.shape, 0)
    scale = jnp.zeros_like(csum)
    shift = jnp.zeros_like(csum)
    for gi in range(groups):                                  # tiny, unrolled
        lo, hi = gi * cpg, (gi + 1) * cpg
        gs = jnp.sum(csum[lo:hi, :], keepdims=True)           # (1, 1)
        gq = jnp.sum(csq[lo:hi, :], keepdims=True)
        mean = gs / count
        var = jnp.maximum(gq / count - mean * mean, 0.0)
        inv = jax.lax.rsqrt(var + GN_EPS)
        in_g = jnp.logical_and(cidx >= lo, cidx < hi)
        sc = inv * gamma_ref[...]                             # (Cout, 1)
        scale = jnp.where(in_g, sc, scale)
        shift = jnp.where(in_g, beta_ref[...] - mean * sc, shift)
    y = conv * scale + shift
    o_ref[0] = jnp.maximum(y, 0.0) + tens_ref[0]


def _stats_kernel(skip_ref, w_ref, b_ref, sum_ref, sq_ref, *,
                  s_tile, s_valid, n_tiles, tiles_per_split, use_vpu):
    """Two-pass path, pass 1: per-(sample, channel) sum / sumsq of the conv."""
    p = pl.program_id(0)                 # S-split (megacore) index
    st = pl.program_id(2)                # S-tile index within the split
    gt = p * tiles_per_split + st        # global S-tile index
    last = n_tiles - 1
    ragged = (s_valid % s_tile) != 0

    @pl.when(st == 0)
    def _():
        sum_ref[...] = jnp.zeros_like(sum_ref)
        sq_ref[...] = jnp.zeros_like(sq_ref)

    conv = _conv1x1(skip_ref[0], w_ref[...], b_ref[...], use_vpu=use_vpu)

    @pl.when(gt < last)                  # interior tiles: never masked
    def _():
        sum_ref[0] += jnp.sum(conv, axis=1, keepdims=True)
        sq_ref[0] += jnp.sum(conv * conv, axis=1, keepdims=True)

    @pl.when(gt == last)                 # last tile: mask only if ragged
    def _():
        c = conv
        if ragged:
            lane = jax.lax.broadcasted_iota(jnp.int32, conv.shape, 1)
            c = jnp.where(lane < (s_valid - last * s_tile), conv, 0.0)
        sum_ref[0] += jnp.sum(c, axis=1, keepdims=True)
        sq_ref[0] += jnp.sum(c * c, axis=1, keepdims=True)


def _apply_kernel(skip_ref, tens_ref, w_ref, b_ref, o_ref, *, use_vpu):
    """Two-pass path, pass 2: conv with GN-folded per-sample weights + ReLU + add."""
    conv = _conv1x1(skip_ref[0], w_ref[0], b_ref[0], use_vpu=use_vpu)
    o_ref[0] = jnp.maximum(conv, 0.0) + tens_ref[0]


# ---------------------------------------------------------------------------
# Module wrapper
# ---------------------------------------------------------------------------
class MergeSkipConnAndAutoCrop:
    def __init__(self, nb_prev_fmaps, nb_fmaps_skip_conn, nb_norm_groups=16,
                 key=None):
        if key is None:
            key = jax.random.PRNGKey(0)
        self.nb_prev_fmaps = nb_prev_fmaps
        self.nb_fmaps_skip_conn = nb_fmaps_skip_conn
        self.nb_norm_groups = nb_norm_groups
        self.identity = (nb_prev_fmaps == nb_fmaps_skip_conn)
        # Test / tuning knobs (defaults = production behavior).
        self._force_two_pass = False
        self._max_lanes_override = None
        if not self.identity:
            assert nb_prev_fmaps % nb_norm_groups == 0
            k1, k2 = jax.random.split(key)
            bound = 1.0 / (nb_fmaps_skip_conn ** 0.5)
            # Conv3d(skip->prev, kernel 1x1x1): weight (Cout, Cin), bias (Cout, 1)
            self.weight = jax.random.uniform(
                k1, (nb_prev_fmaps, nb_fmaps_skip_conn), jnp.float32, -bound, bound)
            self.bias = jax.random.uniform(
                k2, (nb_prev_fmaps, 1), jnp.float32, -bound, bound)
            # GroupNorm affine defaults, stored as (Cout, 1) columns.
            self.gamma = jnp.ones((nb_prev_fmaps, 1), jnp.float32)
            self.beta = jnp.zeros((nb_prev_fmaps, 1), jnp.float32)

    # -- forward ------------------------------------------------------------
    def __call__(self, tensor, skip_connection):
        tensor, skip = auto_crop(tensor, skip_connection)
        N, Ct = int(tensor.shape[0]), int(tensor.shape[1])
        S = 1
        for d in tensor.shape[2:]:
            S *= int(d)
        # NCDHW -> [N, C, S] is a pure reshape (no transpose, no extra HBM pass)
        t_ncs = jnp.reshape(tensor, (N, Ct, S)).astype(jnp.float32)
        s_ncs = jnp.reshape(skip, (N, int(skip.shape[1]), S)).astype(jnp.float32)

        vmem_limit = _vmem_limit_bytes()
        stream_budget = int(0.6 * vmem_limit)
        max_lanes = self._max_lanes_override or 65536

        # ----------------------------- identity ----------------------------
        if self.identity:
            s_tile = _choose_s_tile(S, 4 * Ct, stream_budget, max_lanes)
            n_st = _cdiv(S, s_tile)
            out = pl.pallas_call(
                _add_kernel,
                out_shape=jax.ShapeDtypeStruct((N, Ct, S), jnp.float32),
                grid=(N, n_st),
                in_specs=[pl.BlockSpec((1, Ct, s_tile), lambda n, st: (n, 0, st)),
                          pl.BlockSpec((1, Ct, s_tile), lambda n, st: (n, 0, st))],
                out_specs=pl.BlockSpec((1, Ct, s_tile), lambda n, st: (n, 0, st)),
                input_output_aliases={1: 0},   # out aliases `tensor` operand
                compiler_params=pltpu.CompilerParams(
                    dimension_semantics=("parallel", "parallel"),
                    vmem_limit_bytes=vmem_limit),
            )(s_ncs, t_ncs)
            return jnp.reshape(out, tensor.shape)

        # -------------------------- conv + GN + ReLU ------------------------
        Cin = int(s_ncs.shape[1])
        Cout = self.nb_prev_fmaps
        G = self.nb_norm_groups
        cpg = Cout // G
        use_vpu = (Cout < 8 and Cin * Cout < 128)

        # Single-pass resident-sample fast path: skip read from HBM once.
        fused_bytes = 4 * S * (2 * (Cin + 2 * Cout) + 4 * Cout)
        if (not self._force_two_pass) and fused_bytes <= int(0.8 * vmem_limit):
            fused = functools.partial(_fused_kernel, groups=G, cpg=cpg,
                                      use_vpu=use_vpu)
            out = pl.pallas_call(
                fused,
                out_shape=jax.ShapeDtypeStruct((N, Cout, S), jnp.float32),
                grid=(N,),
                in_specs=[pl.BlockSpec((1, Cin, S), lambda n: (n, 0, 0)),
                          pl.BlockSpec((1, Cout, S), lambda n: (n, 0, 0)),
                          pl.BlockSpec((Cout, Cin), lambda n: (0, 0)),
                          pl.BlockSpec((Cout, 1), lambda n: (0, 0)),
                          pl.BlockSpec((Cout, 1), lambda n: (0, 0)),
                          pl.BlockSpec((Cout, 1), lambda n: (0, 0))],
                out_specs=pl.BlockSpec((1, Cout, S), lambda n: (n, 0, 0)),
                input_output_aliases={1: 0},
                compiler_params=pltpu.CompilerParams(
                    dimension_semantics=("parallel",),
                    vmem_limit_bytes=vmem_limit),
            )(s_ncs, t_ncs, self.weight, self.bias, self.gamma, self.beta)
            return jnp.reshape(out, tensor.shape)

        # ---- two-pass fallback (large S) ----
        # Pass 1: per-(sample, channel) sum / sumsq of the conv output.
        s_tile1 = _choose_s_tile(S, Cin + 2 * Cout, stream_budget, max_lanes)
        n_st1 = _cdiv(S, s_tile1)
        # Megacore: split the S-tiles across a leading parallel axis when the
        # split is exact (even tile count); otherwise single split.
        P = 2 if (n_st1 >= 2 and n_st1 % 2 == 0) else 1
        half = n_st1 // P
        stats = functools.partial(
            _stats_kernel, s_tile=s_tile1, s_valid=S, n_tiles=n_st1,
            tiles_per_split=half, use_vpu=use_vpu)
        psum, psq = pl.pallas_call(
            stats,
            out_shape=(jax.ShapeDtypeStruct((P * N, Cout, 1), jnp.float32),
                       jax.ShapeDtypeStruct((P * N, Cout, 1), jnp.float32)),
            grid=(P, N, half),
            in_specs=[pl.BlockSpec((1, Cin, s_tile1),
                                   lambda p, n, st: (n, 0, p * half + st)),
                      pl.BlockSpec((Cout, Cin), lambda p, n, st: (0, 0)),
                      pl.BlockSpec((Cout, 1), lambda p, n, st: (0, 0))],
            out_specs=(pl.BlockSpec((1, Cout, 1), lambda p, n, st: (p * N + n, 0, 0)),
                       pl.BlockSpec((1, Cout, 1), lambda p, n, st: (p * N + n, 0, 0))),
            compiler_params=pltpu.CompilerParams(
                dimension_semantics=("parallel", "parallel", "arbitrary"),
                vmem_limit_bytes=vmem_limit),
        )(s_ncs, self.weight, self.bias)

        # Tiny per-group statistics + GN scale/shift folded into per-sample
        # conv weights/bias (plain JAX).
        csum = jnp.sum(jnp.reshape(psum, (P, N, Cout)), axis=0)   # [N, Cout]
        csq = jnp.sum(jnp.reshape(psq, (P, N, Cout)), axis=0)
        count = float(S * cpg)
        gsum = jnp.sum(jnp.reshape(csum, (N, G, cpg)), axis=2)
        gsq = jnp.sum(jnp.reshape(csq, (N, G, cpg)), axis=2)
        mean_g = gsum / count
        var_g = jnp.maximum(gsq / count - mean_g * mean_g, 0.0)
        inv_g = jax.lax.rsqrt(var_g + GN_EPS)
        mean_c = jnp.repeat(mean_g, cpg, axis=1)                  # [N, Cout]
        inv_c = jnp.repeat(inv_g, cpg, axis=1)
        scale = inv_c * self.gamma[:, 0][None, :]                 # [N, Cout]
        shift = self.beta[:, 0][None, :] - mean_c * scale
        w_fold = scale[:, :, None] * self.weight[None, :, :]      # [N, Cout, Cin]
        b_fold = (scale * self.bias[:, 0][None, :] + shift)[:, :, None]

        # Pass 2: conv (folded weights) + ReLU + add, lane-dense, aliased out.
        s_tile2 = _choose_s_tile(S, Cin + 3 * Cout, stream_budget, max_lanes)
        n_st2 = _cdiv(S, s_tile2)
        apply_k = functools.partial(_apply_kernel, use_vpu=use_vpu)
        out = pl.pallas_call(
            apply_k,
            out_shape=jax.ShapeDtypeStruct((N, Cout, S), jnp.float32),
            grid=(N, n_st2),
            in_specs=[pl.BlockSpec((1, Cin, s_tile2), lambda n, st: (n, 0, st)),
                      pl.BlockSpec((1, Cout, s_tile2), lambda n, st: (n, 0, st)),
                      pl.BlockSpec((1, Cout, Cin), lambda n, st: (n, 0, 0)),
                      pl.BlockSpec((1, Cout, 1), lambda n, st: (n, 0, 0))],
            out_specs=pl.BlockSpec((1, Cout, s_tile2), lambda n, st: (n, 0, st)),
            input_output_aliases={1: 0},
            compiler_params=pltpu.CompilerParams(
                dimension_semantics=("parallel", "parallel"),
                vmem_limit_bytes=vmem_limit),
        )(s_ncs, t_ncs, w_fold, b_fold)
        return jnp.reshape(out, tensor.shape)

    # -- pure-JAX reference for verification ---------------------------------
    def reference(self, tensor, skip_connection):
        tensor, skip = auto_crop(tensor, skip_connection)
        if self.identity:
            return skip + tensor
        n, cin = int(skip.shape[0]), int(skip.shape[1])
        spatial = skip.shape[2:]
        x = jnp.reshape(skip, (n, cin, -1))
        conv = jnp.einsum('oc,ncs->nos', self.weight, x,
                          precision=jax.lax.Precision.HIGHEST) + self.bias[None]
        cout = conv.shape[1]
        G = self.nb_norm_groups
        g = jnp.reshape(conv, (n, G, cout // G, -1))
        mean = jnp.mean(g, axis=(2, 3), keepdims=True)
        var = jnp.mean((g - mean) ** 2, axis=(2, 3), keepdims=True)
        g = (g - mean) * jax.lax.rsqrt(var + GN_EPS)
        y = (jnp.reshape(g, (n, cout, -1)) * self.gamma[None, :, :]
             + self.beta[None, :, :])
        y = jnp.maximum(y, 0.0)
        y = jnp.reshape(y, (n, cout) + tuple(spatial))
        return y + tensor


# ---------------------------------------------------------------------------
if __name__ == "__main__":
    key = jax.random.PRNGKey(0)
    k_t, k_s, k_p, k_t2, k_s2, k_t3, k_s3, k_p3 = jax.random.split(key, 8)

    # 1) GN path: Conv1x1x1 + GroupNorm + ReLU (MXU conv, fused single-pass)
    #    with auto-crop of the skip connection.
    nb_prev, nb_skip, groups = 8, 16, 4
    tensor = jax.random.normal(k_t, (2, nb_prev, 4, 8, 8), jnp.float32)
    skip = jax.random.normal(k_s, (2, nb_skip, 6, 10, 10), jnp.float32)
    mod = MergeSkipConnAndAutoCrop(nb_prev, nb_skip, groups, key=k_p)
    ref = mod.reference(tensor, skip)
    out = mod(tensor, skip)
    jax.block_until_ready(out)
    assert out.shape == tensor.shape, (out.shape, tensor.shape)
    # MXU path: tolerance covers a possibly reduced-precision matmul pass.
    assert jnp.allclose(out, ref, atol=1e-2, rtol=1e-2), \
        float(jnp.max(jnp.abs(out - ref)))

    # 2) Same module, forced two-pass path with tiny tiles: exercises the
    #    S-split stats pass, ragged last-tile masking and folded weights.
    tensor2 = jax.random.normal(k_t2, (2, nb_prev, 2, 10, 10), jnp.float32)
    skip2 = jax.random.normal(k_s2, (2, nb_skip, 2, 10, 10), jnp.float32)
    mod._force_two_pass = True
    mod._max_lanes_override = 128
    ref2 = mod.reference(tensor2, skip2)
    out2 = mod(tensor2, skip2)
    jax.block_until_ready(out2)
    assert out2.shape == tensor2.shape, (out2.shape, tensor2.shape)
    assert jnp.allclose(out2, ref2, atol=1e-2, rtol=1e-2), \
        float(jnp.max(jnp.abs(out2 - ref2)))
    mod._force_two_pass = False
    mod._max_lanes_override = None

    # 3) GN path on the VPU conv branch (tiny channel counts), tight tolerance.
    mod3 = MergeSkipConnAndAutoCrop(4, 6, 2, key=k_p3)
    tensor3 = jax.random.normal(k_t3, (2, 4, 4, 8, 8), jnp.float32)
    skip3 = jax.random.normal(k_s3, (2, 6, 4, 8, 8), jnp.float32)
    ref3 = mod3.reference(tensor3, skip3)
    out3 = mod3(tensor3, skip3)
    jax.block_until_ready(out3)
    assert jnp.allclose(out3, ref3, atol=1e-4, rtol=1e-4), \
        float(jnp.max(jnp.abs(out3 - ref3)))

    # 4) Identity merge + crop of `tensor` (larger spatial on decoder side).
    mod4 = MergeSkipConnAndAutoCrop(8, 8, 4)
    tensor4 = jax.random.normal(k_t, (2, 8, 6, 10, 10), jnp.float32)
    skip4 = jax.random.normal(k_s, (2, 8, 4, 8, 8), jnp.float32)
    ref4 = mod4.reference(tensor4, skip4)
    out4 = mod4(tensor4, skip4)
    jax.block_until_ready(out4)
    assert out4.shape == skip4.shape, (out4.shape, skip4.shape)
    assert jnp.allclose(out4, ref4, atol=1e-5, rtol=1e-5), \
        float(jnp.max(jnp.abs(out4 - ref4)))

    print("KERNEL_OK")
</pallas_src>

<mosaic_0001>
module attributes {stable_mosaic.version = 11 : i64} {
  func.func @_fused_kernel(%arg0: i32, %arg1: memref<1x16x256xf32, #tpu.memory_space<vmem>>, %arg2: memref<1x8x256xf32, #tpu.memory_space<vmem>>, %arg3: memref<8x16xf32, #tpu.memory_space<vmem>>, %arg4: memref<8x1xf32, #tpu.memory_space<vmem>>, %arg5: memref<8x1xf32, #tpu.memory_space<vmem>>, %arg6: memref<8x1xf32, #tpu.memory_space<vmem>>, %arg7: memref<1x8x256xf32, #tpu.memory_space<vmem>>) attributes {dimension_semantics = [#tpu.dimension_semantics<parallel>], iteration_bounds = array<i64: 2>, scalar_prefetch = 0 : i64, scratch_operands = 0 : i64, tpu.core_type = #tpu.core_type<tc>, window_params = [{transform_indices = @transform_0, window_bounds = array<i64: 1, 16, 256>}, {transform_indices = @transform_1, window_bounds = array<i64: 1, 8, 256>}, {pipeline_mode = #tpu.pipeline_mode<synchronous>, transform_indices = @transform_2, window_bounds = array<i64: 8, 16>}, {pipeline_mode = #tpu.pipeline_mode<synchronous>, transform_indices = @transform_3, window_bounds = array<i64: 8, 1>}, {pipeline_mode = #tpu.pipeline_mode<synchronous>, transform_indices = @transform_4, window_bounds = array<i64: 8, 1>}, {pipeline_mode = #tpu.pipeline_mode<synchronous>, transform_indices = @transform_5, window_bounds = array<i64: 8, 1>}, {transform_indices = @transform_6, window_bounds = array<i64: 1, 8, 256>}]} {
    %c0 = arith.constant 0 : index
    %c0_0 = arith.constant 0 : index
    %c0_1 = arith.constant 0 : index
    %0 = vector.load %arg1[%c0, %c0_0, %c0_1] : memref<1x16x256xf32, #tpu.memory_space<vmem>>, vector<1x16x256xf32>
    %1 = vector.shape_cast %0 : vector<1x16x256xf32> to vector<16x256xf32>
    %c0_2 = arith.constant 0 : index
    %c0_3 = arith.constant 0 : index
    %2 = vector.load %arg3[%c0_2, %c0_3] : memref<8x16xf32, #tpu.memory_space<vmem>>, vector<8x16xf32>
    %c0_4 = arith.constant 0 : index
    %c0_5 = arith.constant 0 : index
    %3 = vector.load %arg4[%c0_4, %c0_5] : memref<8x1xf32, #tpu.memory_space<vmem>>, vector<8x1xf32>
    %cst = arith.constant dense<0.000000e+00> : vector<8x256xf32>
    %4 = tpu.matmul %2, %1, %cst {dimension_numbers = #tpu.dot_dimension_numbers<[1], [0], [0], [1], [0, 0, 1, 1], [], []>} : vector<8x16xf32>, vector<16x256xf32>, vector<8x256xf32> -> vector<8x256xf32>
    %5 = vector.broadcast %3 : vector<8x1xf32> to vector<8x256xf32>
    %6 = arith.addf %4, %5 : vector<8x256xf32>
    %cst_6 = arith.constant dense<0.000000e+00> : vector<8xf32>
    %7 = vector.multi_reduction <add>, %6, %cst_6 [1] : vector<8x256xf32> to vector<8xf32>
    %8 = vector.shape_cast %7 : vector<8xf32> to vector<8x1xf32>
    %9 = arith.mulf %6, %6 : vector<8x256xf32>
    %cst_7 = arith.constant dense<0.000000e+00> : vector<8xf32>
    %10 = vector.multi_reduction <add>, %9, %cst_7 [1] : vector<8x256xf32> to vector<8xf32>
    %11 = vector.shape_cast %10 : vector<8xf32> to vector<8x1xf32>
    %12 = tpu.iota {dimensions = array<i32: 0>} : vector<8x1xi32>
    %cst_8 = arith.constant 0.000000e+00 : f32
    %13 = vector.broadcast %cst_8 : f32 to vector<8x1xf32>
    %cst_9 = arith.constant 0.000000e+00 : f32
    %14 = vector.broadcast %cst_9 : f32 to vector<8x1xf32>
    %15 = vector.extract_strided_slice %8 {offsets = [0, 0], sizes = [2, 1], strides = [1, 1]} : vector<8x1xf32> to vector<2x1xf32>
    %16 = vector.shape_cast %15 : vector<2x1xf32> to vector<1x2x1xf32>
    %cst_10 = arith.constant dense<0.000000e+00> : vector<1xf32>
    %17 = vector.multi_reduction <add>, %16, %cst_10 [1, 2] : vector<1x2x1xf32> to vector<1xf32>
    %18 = vector.shape_cast %17 : vector<1xf32> to vector<1x1x1xf32>
    %19 = vector.extract %18[0, 0, 0] : f32 from vector<1x1x1xf32>
    %20 = vector.broadcast %19 : f32 to vector<1x1xf32>
    %21 = vector.extract_strided_slice %11 {offsets = [0, 0], sizes = [2, 1], strides = [1, 1]} : vector<8x1xf32> to vector<2x1xf32>
    %22 = vector.shape_cast %21 : vector<2x1xf32> to vector<1x2x1xf32>
    %cst_11 = arith.constant dense<0.000000e+00> : vector<1xf32>
    %23 = vector.multi_reduction <add>, %22, %cst_11 [1, 2] : vector<1x2x1xf32> to vector<1xf32>
    %24 = vector.shape_cast %23 : vector<1xf32> to vector<1x1x1xf32>
    %25 = vector.extract %24[0, 0, 0] : f32 from vector<1x1x1xf32>
    %26 = vector.broadcast %25 : f32 to vector<1x1xf32>
    %cst_12 = arith.constant 5.120000e+02 : f32
    %27 = vector.broadcast %cst_12 : f32 to vector<1x1xf32>
    %28 = arith.divf %20, %27 : vector<1x1xf32>
    %cst_13 = arith.constant 5.120000e+02 : f32
    %29 = vector.broadcast %cst_13 : f32 to vector<1x1xf32>
    %30 = arith.divf %26, %29 : vector<1x1xf32>
    %31 = arith.mulf %28, %28 : vector<1x1xf32>
    %32 = arith.subf %30, %31 : vector<1x1xf32>
    %cst_14 = arith.constant 0.000000e+00 : f32
    %33 = vector.broadcast %cst_14 : f32 to vector<1x1xf32>
    %34 = arith.maximumf %32, %33 : vector<1x1xf32>
    %cst_15 = arith.constant 9.99999974E-6 : f32
    %35 = vector.broadcast %cst_15 : f32 to vector<1x1xf32>
    %36 = arith.addf %34, %35 : vector<1x1xf32>
    %37 = math.rsqrt %36 : vector<1x1xf32>
    %c0_i32 = arith.constant 0 : i32
    %38 = vector.broadcast %c0_i32 : i32 to vector<8x1xi32>
    %39 = arith.cmpi sge, %12, %38 : vector<8x1xi32>
    %c2_i32 = arith.constant 2 : i32
    %40 = vector.broadcast %c2_i32 : i32 to vector<8x1xi32>
    %41 = arith.cmpi slt, %12, %40 : vector<8x1xi32>
    %42 = arith.andi %39, %41 : vector<8x1xi1>
    %c0_16 = arith.constant 0 : index
    %c0_17 = arith.constant 0 : index
    %43 = vector.load %arg5[%c0_16, %c0_17] : memref<8x1xf32, #tpu.memory_space<vmem>>, vector<8x1xf32>
    %44 = vector.broadcast %37 : vector<1x1xf32> to vector<8x1xf32>
    %45 = arith.mulf %44, %43 : vector<8x1xf32>
    %46 = arith.select %42, %45, %13 : vector<8x1xi1>, vector<8x1xf32>
    %c0_18 = arith.constant 0 : index
    %c0_19 = arith.constant 0 : index
    %47 = vector.load %arg6[%c0_18, %c0_19] : memref<8x1xf32, #tpu.memory_space<vmem>>, vector<8x1xf32>
    %48 = vector.broadcast %28 : vector<1x1xf32> to vector<8x1xf32>
    %49 = arith.mulf %48, %45 : vector<8x1xf32>
    %50 = arith.subf %47, %49 : vector<8x1xf32>
    %51 = arith.select %42, %50, %14 : vector<8x1xi1>, vector<8x1xf32>
    %52 = vector.extract_strided_slice %8 {offsets = [2, 0], sizes = [2, 1], strides = [1, 1]} : vector<8x1xf32> to vector<2x1xf32>
    %53 = vector.shape_cast %52 : vector<2x1xf32> to vector<1x2x1xf32>
    %cst_20 = arith.constant dense<0.000000e+00> : vector<1xf32>
    %54 = vector.multi_reduction <add>, %53, %cst_20 [1, 2] : vector<1x2x1xf32> to vector<1xf32>
    %55 = vector.shape_cast %54 : vector<1xf32> to vector<1x1x1xf32>
    %56 = vector.extract %55[0, 0, 0] : f32 from vector<1x1x1xf32>
    %57 = vector.broadcast %56 : f32 to vector<1x1xf32>
    %58 = vector.extract_strided_slice %11 {offsets = [2, 0], sizes = [2, 1], strides = [1, 1]} : vector<8x1xf32> to vector<2x1xf32>
    %59 = vector.shape_cast %58 : vector<2x1xf32> to vector<1x2x1xf32>
    %cst_21 = arith.constant dense<0.000000e+00> : vector<1xf32>
    %60 = vector.multi_reduction <add>, %59, %cst_21 [1, 2] : vector<1x2x1xf32> to vector<1xf32>
    %61 = vector.shape_cast %60 : vector<1xf32> to vector<1x1x1xf32>
    %62 = vector.extract %61[0, 0, 0] : f32 from vector<1x1x1xf32>
    %63 = vector.broadcast %62 : f32 to vector<1x1xf32>
    %cst_22 = arith.constant 5.120000e+02 : f32
    %64 = vector.broadcast %cst_22 : f32 to vector<1x1xf32>
    %65 = arith.divf %57, %64 : vector<1x1xf32>
    %cst_23 = arith.constant 5.120000e+02 : f32
    %66 = vector.broadcast %cst_23 : f32 to vector<1x1xf32>
    %67 = arith.divf %63, %66 : vector<1x1xf32>
    %68 = arith.mulf %65, %65 : vector<1x1xf32>
    %69 = arith.subf %67, %68 : vector<1x1xf32>
    %cst_24 = arith.constant 0.000000e+00 : f32
    %70 = vector.broadcast %cst_24 : f32 to vector<1x1xf32>
    %71 = arith.maximumf %69, %70 : vector<1x1xf32>
    %cst_25 = arith.constant 9.99999974E-6 : f32
    %72 = vector.broadcast %cst_25 : f32 to vector<1x1xf32>
    %73 = arith.addf %71, %72 : vector<1x1xf32>
    %74 = math.rsqrt %73 : vector<1x1xf32>
    %c2_i32_26 = arith.constant 2 : i32
    %75 = vector.broadcast %c2_i32_26 : i32 to vector<8x1xi32>
    %76 = arith.cmpi sge, %12, %75 : vector<8x1xi32>
    %c4_i32 = arith.constant 4 : i32
    %77 = vector.broadcast %c4_i32 : i32 to vector<8x1xi32>
    %78 = arith.cmpi slt, %12, %77 : vector<8x1xi32>
    %79 = arith.andi %76, %78 : vector<8x1xi1>
    %c0_27 = arith.constant 0 : index
    %c0_28 = arith.constant 0 : index
    %80 = vector.load %arg5[%c0_27, %c0_28] : memref<8x1xf32, #tpu.memory_space<vmem>>, vector<8x1xf32>
    %81 = vector.broadcast %74 : vector<1x1xf32> to vector<8x1xf32>
    %82 = arith.mulf %81, %80 : vector<8x1xf32>
    %83 = arith.select %79, %82, %46 : vector<8x1xi1>, vector<8x1xf32>
    %c0_29 = arith.constant 0 : index
    %c0_30 = arith.constant 0 : index
    %84 = vector.load %arg6[%c0_29, %c0_30] : memref<8x1xf32, #tpu.memory_space<vmem>>, vector<8x1xf32>
    %85 = vector.broadcast %65 : vector<1x1xf32> to vector<8x1xf32>
    %86 = arith.mulf %85, %82 : vector<8x1xf32>
    %87 = arith.subf %84, %86 : vector<8x1xf32>
    %88 = arith.select %79, %87, %51 : vector<8x1xi1>, vector<8x1xf32>
    %89 = vector.extract_strided_slice %8 {offsets = [4, 0], sizes = [2, 1], strides = [1, 1]} : vector<8x1xf32> to vector<2x1xf32>
    %90 = vector.shape_cast %89 : vector<2x1xf32> to vector<1x2x1xf32>
    %cst_31 = arith.constant dense<0.000000e+00> : vector<1xf32>
    %91 = vector.multi_reduction <add>, %90, %cst_31 [1, 2] : vector<1x2x1xf32> to vector<1xf32>
    %92 = vector.shape_cast %91 : vector<1xf32> to vector<1x1x1xf32>
    %93 = vector.extract %92[0, 0, 0] : f32 from vector<1x1x1xf32>
    %94 = vector.broadcast %93 : f32 to vector<1x1xf32>
    %95 = vector.extract_strided_slice %11 {offsets = [4, 0], sizes = [2, 1], strides = [1, 1]} : vector<8x1xf32> to vector<2x1xf32>
    %96 = vector.shape_cast %95 : vector<2x1xf32> to vector<1x2x1xf32>
    %cst_32 = arith.constant dense<0.000000e+00> : vector<1xf32>
    %97 = vector.multi_reduction <add>, %96, %cst_32 [1, 2] : vector<1x2x1xf32> to vector<1xf32>
    %98 = vector.shape_cast %97 : vector<1xf32> to vector<1x1x1xf32>
    %99 = vector.extract %98[0, 0, 0] : f32 from vector<1x1x1xf32>
    %100 = vector.broadcast %99 : f32 to vector<1x1xf32>
    %cst_33 = arith.constant 5.120000e+02 : f32
    %101 = vector.broadcast %cst_33 : f32 to vector<1x1xf32>
    %102 = arith.divf %94, %101 : vector<1x1xf32>
    %cst_34 = arith.constant 5.120000e+02 : f32
    %103 = vector.broadcast %cst_34 : f32 to vector<1x1xf32>
    %104 = arith.divf %100, %103 : vector<1x1xf32>
    %105 = arith.mulf %102, %102 : vector<1x1xf32>
    %106 = arith.subf %104, %105 : vector<1x1xf32>
    %cst_35 = arith.constant 0.000000e+00 : f32
    %107 = vector.broadcast %cst_35 : f32 to vector<1x1xf32>
    %108 = arith.maximumf %106, %107 : vector<1x1xf32>
    %cst_36 = arith.constant 9.99999974E-6 : f32
    %109 = vector.broadcast %cst_36 : f32 to vector<1x1xf32>
    %110 = arith.addf %108, %109 : vector<1x1xf32>
    %111 = math.rsqrt %110 : vector<1x1xf32>
    %c4_i32_37 = arith.constant 4 : i32
    %112 = vector.broadcast %c4_i32_37 : i32 to vector<8x1xi32>
    %113 = arith.cmpi sge, %12, %112 : vector<8x1xi32>
    %c6_i32 = arith.constant 6 : i32
    %114 = vector.broadcast %c6_i32 : i32 to vector<8x1xi32>
    %115 = arith.cmpi slt, %12, %114 : vector<8x1xi32>
    %116 = arith.andi %113, %115 : vector<8x1xi1>
    %c0_38 = arith.constant 0 : index
    %c0_39 = arith.constant 0 : index
    %117 = vector.load %arg5[%c0_38, %c0_39] : memref<8x1xf32, #tpu.memory_space<vmem>>, vector<8x1xf32>
    %118 = vector.broadcast %111 : vector<1x1xf32> to vector<8x1xf32>
    %119 = arith.mulf %118, %117 : vector<8x1xf32>
    %120 = arith.select %116, %119, %83 : vector<8x1xi1>, vector<8x1xf32>
    %c0_40 = arith.constant 0 : index
    %c0_41 = arith.constant 0 : index
    %121 = vector.load %arg6[%c0_40, %c0_41] : memref<8x1xf32, #tpu.memory_space<vmem>>, vector<8x1xf32>
    %122 = vector.broadcast %102 : vector<1x1xf32> to vector<8x1xf32>
    %123 = arith.mulf %122, %119 : vector<8x1xf32>
    %124 = arith.subf %121, %123 : vector<8x1xf32>
    %125 = arith.select %116, %124, %88 : vector<8x1xi1>, vector<8x1xf32>
    %126 = vector.extract_strided_slice %8 {offsets = [6, 0], sizes = [2, 1], strides = [1, 1]} : vector<8x1xf32> to vector<2x1xf32>
    %127 = vector.shape_cast %126 : vector<2x1xf32> to vector<1x2x1xf32>
    %cst_42 = arith.constant dense<0.000000e+00> : vector<1xf32>
    %128 = vector.multi_reduction <add>, %127, %cst_42 [1, 2] : vector<1x2x1xf32> to vector<1xf32>
    %129 = vector.shape_cast %128 : vector<1xf32> to vector<1x1x1xf32>
    %130 = vector.extract %129[0, 0, 0] : f32 from vector<1x1x1xf32>
    %131 = vector.broadcast %130 : f32 to vector<1x1xf32>
    %132 = vector.extract_strided_slice %11 {offsets = [6, 0], sizes = [2, 1], strides = [1, 1]} : vector<8x1xf32> to vector<2x1xf32>
    %133 = vector.shape_cast %132 : vector<2x1xf32> to vector<1x2x1xf32>
    %cst_43 = arith.constant dense<0.000000e+00> : vector<1xf32>
    %134 = vector.multi_reduction <add>, %133, %cst_43 [1, 2] : vector<1x2x1xf32> to vector<1xf32>
    %135 = vector.shape_cast %134 : vector<1xf32> to vector<1x1x1xf32>
    %136 = vector.extract %135[0, 0, 0] : f32 from vector<1x1x1xf32>
    %137 = vector.broadcast %136 : f32 to vector<1x1xf32>
    %cst_44 = arith.constant 5.120000e+02 : f32
    %138 = vector.broadcast %cst_44 : f32 to vector<1x1xf32>
    %139 = arith.divf %131, %138 : vector<1x1xf32>
    %cst_45 = arith.constant 5.120000e+02 : f32
    %140 = vector.broadcast %cst_45 : f32 to vector<1x1xf32>
    %141 = arith.divf %137, %140 : vector<1x1xf32>
    %142 = arith.mulf %139, %139 : vector<1x1xf32>
    %143 = arith.subf %141, %142 : vector<1x1xf32>
    %cst_46 = arith.constant 0.000000e+00 : f32
    %144 = vector.broadcast %cst_46 : f32 to vector<1x1xf32>
    %145 = arith.maximumf %143, %144 : vector<1x1xf32>
    %cst_47 = arith.constant 9.99999974E-6 : f32
    %146 = vector.broadcast %cst_47 : f32 to vector<1x1xf32>
    %147 = arith.addf %145, %146 : vector<1x1xf32>
    %148 = math.rsqrt %147 : vector<1x1xf32>
    %c6_i32_48 = arith.constant 6 : i32
    %149 = vector.broadcast %c6_i32_48 : i32 to vector<8x1xi32>
    %150 = arith.cmpi sge, %12, %149 : vector<8x1xi32>
    %c8_i32 = arith.constant 8 : i32
    %151 = vector.broadcast %c8_i32 : i32 to vector<8x1xi32>
    %152 = arith.cmpi slt, %12, %151 : vector<8x1xi32>
    %153 = arith.andi %150, %152 : vector<8x1xi1>
    %c0_49 = arith.constant 0 : index
    %c0_50 = arith.constant 0 : index
    %154 = vector.load %arg5[%c0_49, %c0_50] : memref<8x1xf32, #tpu.memory_space<vmem>>, vector<8x1xf32>
    %155 = vector.broadcast %148 : vector<1x1xf32> to vector<8x1xf32>
    %156 = arith.mulf %155, %154 : vector<8x1xf32>
    %157 = arith.select %153, %156, %120 : vector<8x1xi1>, vector<8x1xf32>
    %c0_51 = arith.constant 0 : index
    %c0_52 = arith.constant 0 : index
    %158 = vector.load %arg6[%c0_51, %c0_52] : memref<8x1xf32, #tpu.memory_space<vmem>>, vector<8x1xf32>
    %159 = vector.broadcast %139 : vector<1x1xf32> to vector<8x1xf32>
    %160 = arith.mulf %159, %156 : vector<8x1xf32>
    %161 = arith.subf %158, %160 : vector<8x1xf32>
    %162 = arith.select %153, %161, %125 : vector<8x1xi1>, vector<8x1xf32>
    %163 = vector.broadcast %157 : vector<8x1xf32> to vector<8x256xf32>
    %164 = arith.mulf %6, %163 : vector<8x256xf32>
    %165 = vector.broadcast %162 : vector<8x1xf32> to vector<8x256xf32>
    %166 = arith.addf %164, %165 : vector<8x256xf32>
    %cst_53 = arith.constant 0.000000e+00 : f32
    %167 = vector.broadcast %cst_53 : f32 to vector<8x256xf32>
    %168 = arith.maximumf %166, %167 : vector<8x256xf32>
    %c0_54 = arith.constant 0 : index
    %c0_55 = arith.constant 0 : index
    %c0_56 = arith.constant 0 : index
    %169 = vector.load %arg2[%c0_54, %c0_55, %c0_56] : memref<1x8x256xf32, #tpu.memory_space<vmem>>, vector<1x8x256xf32>
    %170 = vector.shape_cast %169 : vector<1x8x256xf32> to vector<8x256xf32>
    %171 = arith.addf %168, %170 : vector<8x256xf32>
    %c0_57 = arith.constant 0 : index
    %c0_58 = arith.constant 0 : index
    %c0_59 = arith.constant 0 : index
    %172 = vector.load %arg7[%c0_57, %c0_58, %c0_59] : memref<1x8x256xf32, #tpu.memory_space<vmem>>, vector<1x8x256xf32>
    %173 = vector.shape_cast %172 : vector<1x8x256xf32> to vector<8x256xf32>
    %174 = vector.shape_cast %171 : vector<8x256xf32> to vector<1x8x256xf32>
    tpu.vector_store %arg7[%c0_57, %c0_58, %c0_59], %174 {strides = array<i32>} : memref<1x8x256xf32, #tpu.memory_space<vmem>>, vector<1x8x256xf32>,
    return
  }
  func.func @transform_0(%arg0: i32) -> (i32, i32, i32) {
    %c0_i32 = arith.constant 0 : i32
    %c0_i32_0 = arith.constant 0 : i32
    %c0_i32_1 = arith.constant 0 : i32
    return %arg0, %c0_i32, %c0_i32_0 : i32, i32, i32
  }
  func.func @transform_1(%arg0: i32) -> (i32, i32, i32) {
    %c0_i32 = arith.constant 0 : i32
    %c0_i32_0 = arith.constant 0 : i32
    %c0_i32_1 = arith.constant 0 : i32
    return %arg0, %c0_i32, %c0_i32_0 : i32, i32, i32
  }
  func.func @transform_2(%arg0: i32) -> (i32, i32) {
    %c0_i32 = arith.constant 0 : i32
    %c0_i32_0 = arith.constant 0 : i32
    %c0_i32_1 = arith.constant 0 : i32
    return %c0_i32, %c0_i32_0 : i32, i32
  }
  func.func @transform_3(%arg0: i32) -> (i32, i32) {
    %c0_i32 = arith.constant 0 : i32
    %c0_i32_0 = arith.constant 0 : i32
    %c0_i32_1 = arith.constant 0 : i32
    return %c0_i32, %c0_i32_0 : i32, i32
  }
  func.func @transform_4(%arg0: i32) -> (i32, i32) {
    %c0_i32 = arith.constant 0 : i32
    %c0_i32_0 = arith.constant 0 : i32
    %c0_i32_1 = arith.constant 0 : i32
    return %c0_i32, %c0_i32_0 : i32, i32
  }
  func.func @transform_5(%arg0: i32) -> (i32, i32) {
    %c0_i32 = arith.constant 0 : i32
    %c0_i32_0 = arith.constant 0 : i32
    %c0_i32_1 = arith.constant 0 : i32
    return %c0_i32, %c0_i32_0 : i32, i32
  }
  func.func @transform_6(%arg0: i32) -> (i32, i32, i32) {
    %c0_i32 = arith.constant 0 : i32
    %c0_i32_0 = arith.constant 0 : i32
    %c0_i32_1 = arith.constant 0 : i32
    return %arg0, %c0_i32, %c0_i32_0 : i32, i32, i32
  }
}

</mosaic_0001>

<llo_original>
// kernel: tpu_custom_call.1
$region0: #{tpu_custom_call.1}
  #allocation0 [shape = 'u32[]', space=smem, size = 0x4, offset = 0x4, fixed_abs, tag = 'smem constant byte address 0x4 - core index']
  #allocation1 [shape = 'u32[144,128]{1,0:T(1,128)}', space=vmem, size = 0x12000, scoped, tag = 'internal scratch']
  %s0 = inlined_call_operand.vmem [shape: f32[2,16,256], index: 0, kind: input, shape index: {}]
  %s1 = inlined_call_operand.hbm [shape: f32[2,8,256], index: 1, kind: input, shape index: {}, may-alias: {1,6}]
  %s2 = inlined_call_operand.vmem [shape: f32[8,16], index: 2, kind: input, shape index: {}]
  %s3 = inlined_call_operand.vmem [shape: f32[8,1], index: 3, kind: input, shape index: {}]
  %s4 = inlined_call_operand.vmem [shape: f32[8,1], index: 4, kind: input, shape index: {}]
  %s5 = inlined_call_operand.vmem [shape: f32[8,1], index: 5, kind: input, shape index: {}]
  %s6 = inlined_call_operand.hbm [shape: f32[2,8,256], index: 6, kind: output, shape index: {}, may-alias: {1,6}]
  %s7 = sld [smem:[#allocation0]]
  $region61: #{tpu_custom_call.1} parent=0
    _
  %s9 = ssub.s32 1, %s7
  %s10 = scalar_select 0, %s9, %s7
  $region1: #{tpu_custom_call.1} parent=0
    #allocation2 [shape = 'u8[16384]{0}', space=vmem, size = 0x4000, scoped, tag = 'input window, operand 1']
    #allocation3 [shape = 's32[2]{0}', space=sflag, size = 0x8, scoped, tag = 'scoped memory for tpu_custom_call.1']
    #allocation4 [shape = 's32[2]{0}', space=sflag, size = 0x8, scoped, tag = 'scoped memory for tpu_custom_call.1']
    #allocation5 [shape = 'u8[16384]{0}', space=vmem, size = 0x4000, scoped, tag = 'output window, operand 0']
    %11 = vsyncpa [#allocation3], 0
    %s12 = scalar_lea.sflag [#allocation3], 1
    %13 = vsyncpa %s12, 0
    %14 = vsyncpa [#allocation4], 0
    %s15 = scalar_lea.sflag [#allocation4], 1
    %16 = vsyncpa %s15, 0
    loop: start=0, step=1, limit=4
    $region2: #{tpu_custom_call.1} parent=1 // loop_pre_header
      _
    $region3: #{tpu_custom_call.1} parent=1 // loop_header
      %s18 = sphi 0, %s22
      %p19 = scmp.ge.s32.totalorder %s18, 4
      %s28 = sphi 0, %s30
      %s31 = sphi 0, %s28
      %s32 = sphi 0, %s31
      %s48 = sphi 0, %s32
      %s54 = sphi 0, %s56
      %s57 = sphi 0, %s54
      %s58 = sphi 0, %s57
      %s74 = sphi 0, %s58
      %s78 = sphi 0, %s78
      %s80 = sphi 0, %s78
      %s81 = sphi 0, %s80
      %s95 = sphi 0, %s81
      %s99 = sphi 0, %s99
      %s101 = sphi 0, %s99
      %s102 = sphi 0, %s101
      %s116 = sphi 0, %s102
      %s120 = sphi 0, %s120
      %s122 = sphi 0, %s120
      %s123 = sphi 0, %s122
      %s137 = sphi 0, %s123
      %s141 = sphi 0, %s141
      %s143 = sphi 0, %s141
      %s144 = sphi 0, %s143
      %s158 = sphi 0, %s144
      %s164 = sphi 0, %s166
      %s167 = sphi 0, %s164
      %s168 = sphi 0, %s167
      %s184 = sphi 0, %s168
    $region4: #{tpu_custom_call.1} parent=1 // loop_header_branch
      %21 = sbr.rel (%p19) target = $region8
    $region5: #{tpu_custom_call.1} parent=1 // loop_body
      %s23 = ssub.s32 %s18, 1
      %s24 = ssub.s32 %s18, 2
      %s25 = sadd.s32 %s18, 1
      %s26 = ssub.s32 %s18, %s25
      %p27 = scmp.eq.s32.totalorder %s26, 0
      %s29 = sadd.s32 %s28, 1
      %s30 = scalar_select %p27, %s28, %s29
      %p33 = pneg %p27
      %p34 = scmp.eq.s32.totalorder %s18, 1
      %p35 = por %p33, %p34
      %p36 = scmp.ne.s32.totalorder %s28, %s31
      %p37 = scmp.eq.s32.totalorder %s18, 0
      %p38 = por %p36, %p37
      %p39 = scmp.ne.s32.totalorder %s28, %s31
      %p40 = scmp.eq.s32.totalorder %s23, 1
      %p41 = por %p39, %p40
      %p42 = scmp.ne.s32.totalorder %s31, %s32
      %p43 = scmp.eq.s32.totalorder %s23, 0
      %p44 = por %p42, %p43
      %p45 = scmp.ne.s32.totalorder %s31, %s32
      %p46 = scmp.eq.s32.totalorder %s24, 1
      %p47 = por %p45, %p46
      %p49 = scmp.ne.s32.totalorder %s32, %s48
      %p50 = scmp.eq.s32.totalorder %s24, 0
      %p51 = por %p49, %p50
      %s52 = ssub.s32 %s18, %s25
      %p53 = scmp.eq.s32.totalorder %s52, 0
      %s55 = sadd.s32 %s54, 1
      %s56 = scalar_select %p53, %s54, %s55
      %p59 = pneg %p53
      %p60 = scmp.eq.s32.totalorder %s18, 1
      %p61 = por %p59, %p60
      %p62 = scmp.ne.s32.totalorder %s54, %s57
      %p63 = scmp.eq.s32.totalorder %s18, 0
      %p64 = por %p62, %p63
      %p65 = scmp.ne.s32.totalorder %s54, %s57
      %p66 = scmp.eq.s32.totalorder %s23, 1
      %p67 = por %p65, %p66
      %p68 = scmp.ne.s32.totalorder %s57, %s58
      %p69 = scmp.eq.s32.totalorder %s23, 0
      %p70 = por %p68, %p69
      %p71 = scmp.ne.s32.totalorder %s57, %s58
      %p72 = scmp.eq.s32.totalorder %s24, 1
      %p73 = por %p71, %p72
      %p75 = scmp.ne.s32.totalorder %s58, %s74
      %p76 = scmp.eq.s32.totalorder %s24, 0
      %p77 = por %p75, %p76
      %s79 = sadd.s32 %s78, 1
      %p82 = scmp.eq.s32.totalorder %s18, 1
      %p83 = scmp.ne.s32.totalorder %s78, %s80
      %p84 = scmp.eq.s32.totalorder %s18, 0
      %p85 = por %p83, %p84
      %p86 = scmp.ne.s32.totalorder %s78, %s80
      %p87 = scmp.eq.s32.totalorder %s23, 1
      %p88 = por %p86, %p87
      %p89 = scmp.ne.s32.totalorder %s80, %s81
      %p90 = scmp.eq.s32.totalorder %s23, 0
      %p91 = por %p89, %p90
      %p92 = scmp.ne.s32.totalorder %s80, %s81
      %p93 = scmp.eq.s32.totalorder %s24, 1
      %p94 = por %p92, %p93
      %p96 = scmp.ne.s32.totalorder %s81, %s95
      %p97 = scmp.eq.s32.totalorder %s24, 0
      %p98 = por %p96, %p97
      %s100 = sadd.s32 %s99, 1
      %p103 = scmp.eq.s32.totalorder %s18, 1
      %p104 = scmp.ne.s32.totalorder %s99, %s101
      %p105 = scmp.eq.s32.totalorder %s18, 0
      %p106 = por %p104, %p105
      %p107 = scmp.ne.s32.totalorder %s99, %s101
      %p108 = scmp.eq.s32.totalorder %s23, 1
      %p109 = por %p107, %p108
      %p110 = scmp.ne.s32.totalorder %s101, %s102
      %p111 = scmp.eq.s32.totalorder %s23, 0
      %p112 = por %p110, %p111
      %p113 = scmp.ne.s32.totalorder %s101, %s102
      %p114 = scmp.eq.s32.totalorder %s24, 1
      %p115 = por %p113, %p114
      %p117 = scmp.ne.s32.totalorder %s102, %s116
      %p118 = scmp.eq.s32.totalorder %s24, 0
      %p119 = por %p117, %p118
      %s121 = sadd.s32 %s120, 1
      %p124 = scmp.eq.s32.totalorder %s18, 1
      %p125 = scmp.ne.s32.totalorder %s120, %s122
      %p126 = scmp.eq.s32.totalorder %s18, 0
      %p127 = por %p125, %p126
      %p128 = scmp.ne.s32.totalorder %s120, %s122
      %p129 = scmp.eq.s32.totalorder %s23, 1
      %p130 = por %p128, %p129
      %p131 = scmp.ne.s32.totalorder %s122, %s123
      %p132 = scmp.eq.s32.totalorder %s23, 0
      %p133 = por %p131, %p132
      %p134 = scmp.ne.s32.totalorder %s122, %s123
      %p135 = scmp.eq.s32.totalorder %s24, 1
      %p136 = por %p134, %p135
      %p138 = scmp.ne.s32.totalorder %s123, %s137
      %p139 = scmp.eq.s32.totalorder %s24, 0
      %p140 = por %p138, %p139
      %s142 = sadd.s32 %s141, 1
      %p145 = scmp.eq.s32.totalorder %s18, 1
      %p146 = scmp.ne.s32.totalorder %s141, %s143
      %p147 = scmp.eq.s32.totalorder %s18, 0
      %p148 = por %p146, %p147
      %p149 = scmp.ne.s32.totalorder %s141, %s143
      %p150 = scmp.eq.s32.totalorder %s23, 1
      %p151 = por %p149, %p150
      %p152 = scmp.ne.s32.totalorder %s143, %s144
      %p153 = scmp.eq.s32.totalorder %s23, 0
      %p154 = por %p152, %p153
      %p155 = scmp.ne.s32.totalorder %s143, %s144
      %p156 = scmp.eq.s32.totalorder %s24, 1
      %p157 = por %p155, %p156
      %p159 = scmp.ne.s32.totalorder %s144, %s158
      %p160 = scmp.eq.s32.totalorder %s24, 0
      %p161 = por %p159, %p160
      %s162 = ssub.s32 %s18, %s25
      %p163 = scmp.eq.s32.totalorder %s162, 0
      %s165 = sadd.s32 %s164, 1
      %s166 = scalar_select %p163, %s164, %s165
      %p169 = pneg %p163
      %p170 = scmp.eq.s32.totalorder %s18, 1
      %p171 = por %p169, %p170
      %p172 = scmp.ne.s32.totalorder %s164, %s167
      %p173 = scmp.eq.s32.totalorder %s18, 0
      %p174 = por %p172, %p173
      %p175 = scmp.ne.s32.totalorder %s164, %s167
      %p176 = scmp.eq.s32.totalorder %s23, 1
      %p177 = por %p175, %p176
      %p178 = scmp.ne.s32.totalorder %s167, %s168
      %p179 = scmp.eq.s32.totalorder %s23, 0
      %p180 = por %p178, %p179
      %p181 = scmp.ne.s32.totalorder %s167, %s168
      %p182 = scmp.eq.s32.totalorder %s24, 1
      %p183 = por %p181, %p182
      %p185 = scmp.ne.s32.totalorder %s168, %s184
      %p186 = scmp.eq.s32.totalorder %s24, 0
      %p187 = por %p185, %p186
      %p188 = scmp.le.s32.totalorder 1, %s18
      %p189 = scmp.lt.s32.totalorder %s18, 3
      %p190 = pnand %p188, %p189
      %p191 = pneg %p190
      // Predicated region
      $region9: #{tpu_custom_call.1} parent=5 // pred_check
        _
      $region10: #{tpu_custom_call.1} parent=5 // pred_check_branch
        %193 = sbr.rel (%p190) target = $region12
      $region11: #{tpu_custom_call.1} parent=5 // pred_region
        %s194 = ssub.s32 %s18, 1
        // Predicated region
        $region13: #{tpu_custom_call.1} parent=11 // pred_check
          %p195 = pneg %p91
        $region14: #{tpu_custom_call.1} parent=11 // pred_check_branch
          %197 = sbr.rel (%p195) target = $region16
        $region15: #{tpu_custom_call.1} parent=11 // pred_region
          _
        $region16: #{tpu_custom_call.1} parent=11 // pred_fallthru
          _
        // Predicated region
        $region17: #{tpu_custom_call.1} parent=11 // pred_check
          %p198 = pneg %p112
        $region18: #{tpu_custom_call.1} parent=11 // pred_check_branch
          %200 = sbr.rel (%p198) target = $region20
        $region19: #{tpu_custom_call.1} parent=11 // pred_region
          _
        $region20: #{tpu_custom_call.1} parent=11 // pred_fallthru
          _
        // Predicated region
        $region21: #{tpu_custom_call.1} parent=11 // pred_check
          %p201 = pneg %p133
        $region22: #{tpu_custom_call.1} parent=11 // pred_check_branch
          %203 = sbr.rel (%p201) target = $region24
        $region23: #{tpu_custom_call.1} parent=11 // pred_region
          _
        $region24: #{tpu_custom_call.1} parent=11 // pred_fallthru
          _
        // Predicated region
        $region25: #{tpu_custom_call.1} parent=11 // pred_check
          %p204 = pneg %p154
        $region26: #{tpu_custom_call.1} parent=11 // pred_check_branch
          %206 = sbr.rel (%p204) target = $region28
        $region27: #{tpu_custom_call.1} parent=11 // pred_region
          _
        $region28: #{tpu_custom_call.1} parent=11 // pred_fallthru
          _
      $region12: #{tpu_custom_call.1} parent=5 // pred_fallthru
        _
      %p207 = scmp.lt.s32.totalorder %s18, 2
      // Predicated region
      $region29: #{tpu_custom_call.1} parent=5 // pred_check
        %p208 = pneg %p207
      $region30: #{tpu_custom_call.1} parent=5 // pred_check_branch
        %210 = sbr.rel (%p208) target = $region32
      $region31: #{tpu_custom_call.1} parent=5 // pred_region
        // Predicated region
        $region33: #{tpu_custom_call.1} parent=31 // pred_check
          %p211 = pneg %p38
        $region34: #{tpu_custom_call.1} parent=31 // pred_check_branch
          %213 = sbr.rel (%p211) target = $region36
        $region35: #{tpu_custom_call.1} parent=31 // pred_region
          %p214 = scmp.lt.s32.totalorder %s18, 1
          %s215 = scalar_select %p214, %s18, 1
          %s216 = smul.addr %s215, 4
          %s217 = smul.addr %s216, 8
          %s218 = scalar_lea.vmem %s0, %s217
        $region36: #{tpu_custom_call.1} parent=31 // pred_fallthru
          _
        // Predicated region
        $region37: #{tpu_custom_call.1} parent=31 // pred_check
          %p219 = pneg %p64
        $region38: #{tpu_custom_call.1} parent=31 // pred_check_branch
          %221 = sbr.rel (%p219) target = $region40
        $region39: #{tpu_custom_call.1} parent=31 // pred_region
          %s222 = sand.u32 %s54, 1
          %s223 = scalar_lea.sflag [#allocation3], %s222
          %s224 = sand.u32 %s54, 1
          %s225 = smul.addr %s224, 16
          %s226 = scalar_lea.vmem [#allocation2], %s225
          %s228 = ssub.s32 256, 256
          %229 = vsyncadd %s223, %s228
          %s230 = smul.addr %s18, 2
          %s231 = smul.addr %s230, 128
          %s232 = scalar_lea.hbm %s1, %s231
          %s234 = sshll.u32 %s226, 4
          %s235 = int_to_ptr.vmem [resolvable:$true] %s234
          %237 = dma.hbm_to_vmem [thread:$0]  %s232, 256, %s235, %s223
        $region40: #{tpu_custom_call.1} parent=31 // pred_fallthru
          _
      $region32: #{tpu_custom_call.1} parent=5 // pred_fallthru
        _
      %p238 = scmp.le.s32.totalorder 1, %s18
      %p239 = scmp.lt.s32.totalorder %s18, 3
      %p240 = pnand %p238, %p239
      %p241 = pneg %p240
      // Predicated region
      $region41: #{tpu_custom_call.1} parent=5 // pred_check
        _
      $region42: #{tpu_custom_call.1} parent=5 // pred_check_branch
        %243 = sbr.rel (%p240) target = $region44
      $region43: #{tpu_custom_call.1} parent=5 // pred_region
        %s244 = ssub.s32 %s18, 1
        %s245 = sand.u32 %s57, 1
        %s246 = scalar_lea.sflag [#allocation3], %s245
        %s247 = sand.u32 %s57, 1
        %s248 = smul.addr %s247, 16
        %s249 = scalar_lea.vmem [#allocation2], %s248
        // Predicated region
        $region45: #{tpu_custom_call.1} parent=43 // pred_check
          %p250 = pneg %p70
        $region46: #{tpu_custom_call.1} parent=43 // pred_check_branch
          %252 = sbr.rel (%p250) target = $region48
        $region47: #{tpu_custom_call.1} parent=43 // pred_region
          %253 = dma.done %s246, 256
        $region48: #{tpu_custom_call.1} parent=43 // pred_fallthru
          _
        %p254 = scmp.lt.s32.totalorder %s23, 1
        %s255 = scalar_select %p254, %s23, 1
        %s256 = smul.addr %s255, 4
        %s257 = smul.addr %s256, 8
        %s258 = scalar_lea.vmem %s0, %s257
        %p259 = pneg %p44
        %p260 = pneg %p41
        %s261 = sand.u32 %s57, 1
        %s262 = scalar_lea.sflag [#allocation3], %s261
        %s263 = sand.u32 %s57, 1
        %s264 = smul.addr %s263, 16
        %s265 = scalar_lea.vmem [#allocation2], %s264
        %p266 = pneg %p70
        %p267 = pneg %p67
        %p268 = pneg %p91
        %p269 = pneg %p88
        %p270 = pneg %p112
        %p271 = pneg %p109
        %p272 = pneg %p133
        %p273 = pneg %p130
        %p274 = pneg %p154
        %p275 = pneg %p151
        %p276 = pneg %p180
        %p277 = pneg %p177
        %s278 = sand.u32 %s167, 1
        %s279 = scalar_lea.sflag [#allocation4], %s278
        %s280 = sand.u32 %s167, 1
        %s281 = smul.addr %s280, 16
        %s282 = scalar_lea.vmem [#allocation5], %s281
        %p283 = scmp.lt.s32.totalorder %s23, 1
        %s284 = scalar_select %p283, %s23, 1
        %s285 = smul.addr %s284, 4
        %s286 = smul.addr %s285, 8
        %s287 = scalar_lea.vmem %s0, %s286
        %v288 = vld [vmem:[%s287] sm:$0xff]
        %v289 = vld [vmem:[%s287 + $0x8] sm:$0xff]
        %v290 = vld [vmem:[%s287 + $0x10] sm:$0xff]
        %v291 = vld [vmem:[%s287 + $0x18] sm:$0xff]
        %v292 = vld [vmem:[%s2] sm:$0xff]
        %v293 = vld [vmem:[%s3] sm:$0xff]
        %295 = vset.pattern.permute.xlu0 0
        %296 = vperm.xlu0 %295, %v293
        %v297 = vpop.permute.xlu0 %296
        %vm299 = vcmask 130048
        %v301 = vsel %vm299, %v292, 0
        %303 = vmatprep.subr.mxu0 0.0
        %304 = vmatpush1.msra.mxu0 0.0
        %305 = vmatprep.subr.mxu0 0.0
        %306 = vmatpush1.msra.mxu0 0.0
        %307 = vmatprep.subr.mxu0 0.0
        %308 = vmatpush1.msra.mxu0 0.0
        %309 = vmatprep.subr.mxu0 0.0
        %310 = vmatpush1.msra.mxu0 0.0
        %311 = vmatprep.subr.mxu0 0.0
        %312 = vmatpush1.msra.mxu0 0.0
        %313 = vmatprep.subr.mxu0 0.0
        %314 = vmatpush1.msra.mxu0 0.0
        %315 = vmatprep.subr.mxu0 0.0
        %316 = vmatpush1.msra.mxu0 0.0
        %317 = vmatprep.subr.mxu0 0.0
        %318 = vmatpush1.msra.mxu0 0.0
        %319 = vmatprep.subr.mxu0 0.0
        %320 = vmatpush1.msra.mxu0 0.0
        %321 = vmatprep.subr.mxu0 0.0
        %322 = vmatpush1.msra.mxu0 0.0
        %323 = vmatprep.subr.mxu0 0.0
        %324 = vmatpush1.msra.mxu0 0.0
        %325 = vmatprep.subr.mxu0 0.0
        %326 = vmatpush1.msra.mxu0 0.0
        %327 = vmatprep.subr.mxu0 0.0
        %328 = vmatpush1.msra.mxu0 0.0
        %329 = vmatprep.subr.mxu0 0.0
        %330 = vmatpush1.msra.mxu0 0.0
        %331 = vmatprep.subr.mxu0 %v291
        %332 = vmatpush1.msra.mxu0 %v290
        %333 = vmatprep.subr.mxu0 %v289
        %334 = vmatpush1.msra.mxu0 %v288
        %335 = vmatprep.subr.mxu0 0.0
        %336 = vmatpush2.msra.mxu0 0.0
        %337 = vmatprep.subr.mxu0 0.0
        %338 = vmatpush2.msra.mxu0 0.0
        %339 = vmatprep.subr.mxu0 0.0
        %340 = vmatpush2.msra.mxu0 0.0
        %341 = vmatprep.subr.mxu0 0.0
        %342 = vmatpush2.msra.mxu0 0.0
        %343 = vmatprep.subr.mxu0 0.0
        %344 = vmatpush2.msra.mxu0 0.0
        %345 = vmatprep.subr.mxu0 0.0
        %346 = vmatpush2.msra.mxu0 0.0
        %347 = vmatprep.subr.mxu0 0.0
        %348 = vmatpush2.msra.mxu0 0.0
        %349 = vmatprep.subr.mxu0 0.0
        %350 = vmatpush2.msra.mxu0 0.0
        %351 = vmatprep.subr.mxu0 0.0
        %352 = vmatpush2.msra.mxu0 0.0
        %353 = vmatprep.subr.mxu0 0.0
        %354 = vmatpush2.msra.mxu0 0.0
        %355 = vmatprep.subr.mxu0 0.0
        %356 = vmatpush2.msra.mxu0 0.0
        %357 = vmatprep.subr.mxu0 0.0
        %358 = vmatpush2.msra.mxu0 0.0
        %359 = vmatprep.subr.mxu0 0.0
        %360 = vmatpush2.msra.mxu0 0.0
        %361 = vmatprep.subr.mxu0 0.0
        %362 = vmatpush2.msra.mxu0 0.0
        %363 = vmatprep.subr.mxu0 0.0
        %364 = vmatpush2.msra.mxu0 0.0
        %365 = vmatprep.subr.mxu0 0.0
        %366 = vmatpush2.msra.mxu0 0.0
        %367 = vmatprep.mubr.f32.mxu0 0.0
        %368 = vmatmul.mubr.f32.gmra.mxu0 %v301
        %v369 = vpop.f32.mrf.mxu0
        %v370 = vadd.f32 %v297, %v369
        %v371 = vpop.f32.mrf.mxu0
        %v372 = vadd.f32 %v297, %v371
        %373 = vdwg.mxu0
        %v374 = vadd.f32 %v370, %v372
        %375 = vadd.xlane.f32.xlu0 %v374
        %v376 = vpop.xlane.xlu0 %375
        %v377 = vmul.f32 %v370, %v370
        %v378 = vmul.f32 %v372, %v372
        %v379 = vadd.f32 %v377, %v378
        %380 = vadd.xlane.f32.xlu0 %v379
        %v381 = vpop.xlane.xlu0 %380
        %v382 = vlaneseq
        %v383 = vshrl.u32 %v382, 7
        %vm384 = vcmask 1024
        %v385 = vsel %vm384, %v376, 0.0
        %386 = vadd.xlane.f32.xlu0 %v385
        %v387 = vpop.xlane.xlu0 %386
        %v388 = vrot.slane %v387, 4
        %v389 = vadd.f32 %v387, %v388
        %v390 = vrot.slane %v389, 2
        %v391 = vadd.f32 %v389, %v390
        %v392 = vrot.slane %v391, 1
        %v393 = vadd.f32 %v391, %v392
        %s394 = vtos %v393
        %v395 = vstv %s394
        %v396 = vsel %vm384, %v381, 0.0
        %397 = vadd.xlane.f32.xlu0 %v396
        %v398 = vpop.xlane.xlu0 %397
        %v399 = vrot.slane %v398, 4
        %v400 = vadd.f32 %v398, %v399
        %v401 = vrot.slane %v400, 2
        %v402 = vadd.f32 %v400, %v401
        %v403 = vrot.slane %v402, 1
        %v404 = vadd.f32 %v402, %v403
        %s405 = vtos %v404
        %v406 = vstv %s405
        %v407 = vrcp.pop 512.0
        %v408 = vmul.f32 %v395, %v407
        %v409 = vmul.f32 %v406, %v407
        %v410 = vmul.f32 %v408, %v408
        %v411 = vsub.f32 %v409, %v410
        %v412 = vmax.f32 %v411, 0.0
        %v413 = vadd.f32 %v412, 1e-05
        %v414 = vrsqrt.pop %v413
        %vm415 = vcmp.ge.s32.totalorder %v383, 0
        %vm416 = vcmp.lt.s32.totalorder %v383, 2
        %vm417 = vmand %vm415, %vm416
        %v418 = vld [vmem:[%s4] sm:$0xff]
        %v419 = vmul.f32 %v414, %v418
        %v420 = vsel %vm417, %v419, 0.0
        %v421 = vld [vmem:[%s5] sm:$0xff]
        %v422 = vmul.f32 %v408, %v419
        %v423 = vsub.f32 %v421, %v422
        %v424 = vsel %vm417, %v423, 0.0
        %v426 = vrot.slane %v376, 2
        %v428 = vsel %vm384, %v426, 0.0
        %429 = vadd.xlane.f32.xlu0 %v428
        %v430 = vpop.xlane.xlu0 %429
        %v431 = vrot.slane %v430, 4
        %v432 = vadd.f32 %v430, %v431
        %v433 = vrot.slane %v432, 2
        %v434 = vadd.f32 %v432, %v433
        %v435 = vrot.slane %v434, 1
        %v436 = vadd.f32 %v434, %v435
        %s437 = vtos %v436
        %v438 = vstv %s437
        %v440 = vrot.slane %v381, 2
        %v442 = vsel %vm384, %v440, 0.0
        %443 = vadd.xlane.f32.xlu0 %v442
        %v444 = vpop.xlane.xlu0 %443
        %v445 = vrot.slane %v444, 4
        %v446 = vadd.f32 %v444, %v445
        %v447 = vrot.slane %v446, 2
        %v448 = vadd.f32 %v446, %v447
        %v449 = vrot.slane %v448, 1
        %v450 = vadd.f32 %v448, %v449
        %s451 = vtos %v450
        %v452 = vstv %s451
        %v453 = vmul.f32 %v438, %v407
        %v454 = vmul.f32 %v452, %v407
        %v455 = vmul.f32 %v453, %v453
        %v456 = vsub.f32 %v454, %v455
        %v457 = vmax.f32 %v456, 0.0
        %v458 = vadd.f32 %v457, 1e-05
        %v459 = vrsqrt.pop %v458
        %vm460 = vcmp.ge.s32.totalorder %v383, 2
        %vm461 = vcmp.lt.s32.totalorder %v383, 4
        %vm462 = vmand %vm460, %vm461
        %v463 = vmul.f32 %v459, %v418
        %v464 = vsel %vm462, %v463, %v420
        %v465 = vmul.f32 %v453, %v463
        %v466 = vsub.f32 %v421, %v465
        %v467 = vsel %vm462, %v466, %v424
        %v468 = vrot.slane %v376, 4
        %v470 = vsel %vm384, %v468, 0.0
        %471 = vadd.xlane.f32.xlu0 %v470
        %v472 = vpop.xlane.xlu0 %471
        %v473 = vrot.slane %v472, 4
        %v474 = vadd.f32 %v472, %v473
        %v475 = vrot.slane %v474, 2
        %v476 = vadd.f32 %v474, %v475
        %v477 = vrot.slane %v476, 1
        %v478 = vadd.f32 %v476, %v477
        %s479 = vtos %v478
        %v480 = vstv %s479
        %v481 = vrot.slane %v381, 4
        %v483 = vsel %vm384, %v481, 0.0
        %484 = vadd.xlane.f32.xlu0 %v483
        %v485 = vpop.xlane.xlu0 %484
        %v486 = vrot.slane %v485, 4
        %v487 = vadd.f32 %v485, %v486
        %v488 = vrot.slane %v487, 2
        %v489 = vadd.f32 %v487, %v488
        %v490 = vrot.slane %v489, 1
        %v491 = vadd.f32 %v489, %v490
        %s492 = vtos %v491
        %v493 = vstv %s492
        %v494 = vmul.f32 %v480, %v407
        %v495 = vmul.f32 %v493, %v407
        %v496 = vmul.f32 %v494, %v494
        %v497 = vsub.f32 %v495, %v496
        %v498 = vmax.f32 %v497, 0.0
        %v499 = vadd.f32 %v498, 1e-05
        %v500 = vrsqrt.pop %v499
        %vm501 = vcmp.ge.s32.totalorder %v383, 4
        %vm502 = vcmp.lt.s32.totalorder %v383, 6
        %vm503 = vmand %vm501, %vm502
        %v504 = vmul.f32 %v500, %v418
        %v505 = vsel %vm503, %v504, %v464
        %v506 = vmul.f32 %v494, %v504
        %v507 = vsub.f32 %v421, %v506
        %v508 = vsel %vm503, %v507, %v467
        %v509 = vrot.slane %v376, 6
        %v511 = vsel %vm384, %v509, 0.0
        %512 = vadd.xlane.f32.xlu0 %v511
        %v513 = vpop.xlane.xlu0 %512
        %v514 = vrot.slane %v513, 4
        %v515 = vadd.f32 %v513, %v514
        %v516 = vrot.slane %v515, 2
        %v517 = vadd.f32 %v515, %v516
        %v518 = vrot.slane %v517, 1
        %v519 = vadd.f32 %v517, %v518
        %s520 = vtos %v519
        %v521 = vstv %s520
        %v522 = vrot.slane %v381, 6
        %v524 = vsel %vm384, %v522, 0.0
        %525 = vadd.xlane.f32.xlu0 %v524
        %v526 = vpop.xlane.xlu0 %525
        %v527 = vrot.slane %v526, 4
        %v528 = vadd.f32 %v526, %v527
        %v529 = vrot.slane %v528, 2
        %v530 = vadd.f32 %v528, %v529
        %v531 = vrot.slane %v530, 1
        %v532 = vadd.f32 %v530, %v531
        %s533 = vtos %v532
        %v534 = vstv %s533
        %v535 = vmul.f32 %v521, %v407
        %v536 = vmul.f32 %v534, %v407
        %v537 = vmul.f32 %v535, %v535
        %v538 = vsub.f32 %v536, %v537
        %v539 = vmax.f32 %v538, 0.0
        %v540 = vadd.f32 %v539, 1e-05
        %v541 = vrsqrt.pop %v540
        %vm542 = vcmp.ge.s32.totalorder %v383, 6
        %vm543 = vcmp.lt.s32.totalorder %v383, 8
        %vm544 = vmand %vm542, %vm543
        %v545 = vmul.f32 %v541, %v418
        %v546 = vsel %vm544, %v545, %v505
        %v547 = vmul.f32 %v535, %v545
        %v548 = vsub.f32 %v421, %v547
        %v549 = vsel %vm544, %v548, %v508
        %551 = vset.pattern.permute.xlu0 0
        %552 = vperm.xlu0 %551, %v546
        %v553 = vpop.permute.xlu0 %552
        %v555 = vmul.f32 %v370, %v553
        %v556 = vmul.f32 %v372, %v553
        %558 = vset.pattern.permute.xlu0 0
        %559 = vperm.xlu0 %558, %v549
        %v560 = vpop.permute.xlu0 %559
        %v562 = vadd.f32 %v555, %v560
        %v563 = vadd.f32 %v556, %v560
        %v564 = vmax.f32 %v562, 0.0
        %v565 = vmax.f32 %v563, 0.0
        %v566 = vld [vmem:[%s249] sm:$0xff]
        %v567 = vld [vmem:[%s249 + $0x8] sm:$0xff]
        %v568 = vadd.f32 %v564, %v566
        %v569 = vadd.f32 %v565, %v567
        %570 = vst [vmem:[%s282] sm:$0xff] %v568
        %571 = vst [vmem:[%s282 + $0x8] sm:$0xff] %v569
        %s572 = sand.u32 %s167, 1
        %s573 = scalar_lea.sflag [#allocation4], %s572
        %s574 = sand.u32 %s167, 1
        %s575 = smul.addr %s574, 16
        %s576 = scalar_lea.vmem [#allocation5], %s575
        // Predicated region
        $region49: #{tpu_custom_call.1} parent=43 // pred_check
          %p577 = pneg %p177
        $region50: #{tpu_custom_call.1} parent=43 // pred_check_branch
          %579 = sbr.rel (%p577) target = $region52
        $region51: #{tpu_custom_call.1} parent=43 // pred_region
          %s581 = ssub.s32 256, 256
          %582 = vsyncadd %s573, %s581
          %s583 = smul.addr %s23, 2
          %s584 = smul.addr %s583, 128
          %s585 = scalar_lea.hbm %s6, %s584
          %s587 = sshll.u32 %s576, 4
          %s588 = int_to_ptr.vmem [resolvable:$true] %s587
          %590 = dma.vmem_to_hbm [thread:$0]  %s588, 256, %s585, %s573
        $region52: #{tpu_custom_call.1} parent=43 // pred_fallthru
          _
      $region44: #{tpu_custom_call.1} parent=5 // pred_fallthru
        _
      %p591 = scmp.le.s32.totalorder 2, %s18
      // Predicated region
      $region53: #{tpu_custom_call.1} parent=5 // pred_check
        %p592 = pneg %p591
      $region54: #{tpu_custom_call.1} parent=5 // pred_check_branch
        %594 = sbr.rel (%p592) target = $region56
      $region55: #{tpu_custom_call.1} parent=5 // pred_region
        %s595 = ssub.s32 %s18, 2
        // Predicated region
        $region57: #{tpu_custom_call.1} parent=55 // pred_check
          %p596 = pneg %p183
        $region58: #{tpu_custom_call.1} parent=55 // pred_check_branch
          %598 = sbr.rel (%p596) target = $region60
        $region59: #{tpu_custom_call.1} parent=55 // pred_region
          %s599 = sand.u32 %s168, 1
          %s600 = scalar_lea.sflag [#allocation4], %s599
          %s601 = sand.u32 %s168, 1
          %s602 = smul.addr %s601, 16
          %s603 = scalar_lea.vmem [#allocation5], %s602
          %604 = dma.done %s600, 256
        $region60: #{tpu_custom_call.1} parent=55 // pred_fallthru
          _
      $region56: #{tpu_custom_call.1} parent=5 // pred_fallthru
        _
    $region6: #{tpu_custom_call.1} parent=1 // loop_footer
      %s22 = sadd.s32 1, %s18
    $region7: #{tpu_custom_call.1} parent=1 // loop_footer_branch
      %17 = sbr.rel target = $region3
    $region8: #{tpu_custom_call.1} parent=1 // loop_exit
      _
    %605 = vsyncpa [#allocation3], 1
    %s606 = scalar_lea.sflag [#allocation3], 1
    %607 = vsyncpa %s606, 1
    %608 = vsyncpa [#allocation4], 1
    %s609 = scalar_lea.sflag [#allocation4], 1
    %610 = vsyncpa %s609, 1

</llo_original>
